<compile_context>
chip_gen: v7x
topology: tpu7x:2x2x1
jax: 0.10.0
libtpu: 0.0.40
codegen_flags: <defaults>
</compile_context>

<pallas_src>
import functools

import jax
import jax.numpy as jnp
from jax.experimental import pallas as pl
from jax.experimental.pallas import tpu as pltpu


def _mixed_op_kernel(x_ref,     # VMEM (RB, T, C)   input rows
                     mask_ref,  # VMEM (RB, T)      mask (lane-dense layout)
                     w_ref,     # VMEM (3C, C)      folded conv weights
                     b_ref,     # VMEM (1, C)       folded bias
                     o_ref):    # VMEM (RB, T, C)
    x = x_ref[...]                                  # already f32, no-op cast removed
    RB, T, C = x.shape

    # Causal shifts via static zero-prefix + slice (layout-only, no roll/iota/where).
    s1 = jnp.concatenate([jnp.zeros((RB, 1, C), x.dtype), x[:, :T - 1, :]], axis=1)
    s2 = jnp.concatenate([jnp.zeros((RB, 2, C), x.dtype), x[:, :T - 2, :]], axis=1)

    # Lane-concat the taps -> single contraction of width 3C on the MXU.
    xs = jnp.concatenate([x, s1, s2], axis=-1)      # (RB, T, 3C)

    # One matmul: (RB*T, 3C) @ (3C, C). T == 8 keeps the collapse sublane-aligned,
    # so the reshape is layout-free.
    y = jnp.dot(xs.reshape(RB * T, 3 * C), w_ref[...],
                preferred_element_type=jnp.float32).reshape(RB, T, C)

    # Single hoisted bias add + single mask broadcast/multiply.
    y = y + b_ref[...]                              # (1, C) broadcast once
    o_ref[...] = (y * mask_ref[...][:, :, None]).astype(o_ref.dtype)


def temporal_layer_mixed_op(x_bcnt, mask_bnt, alphas, w2, b2, w3, b3,
                            *, row_block=None):
    """x_bcnt: (B, C, N, T) float32; mask_bnt: (B, N, T); returns (B, C, N, T)."""
    B, C, N, T = x_bcnt.shape
    assert T >= 3, "temporal length must cover the K=3 conv taps"
    rows = B * N

    if row_block is None:
        # Keep >= 2 parallel grid steps (v7x has 2 TensorCores) while maximizing
        # per-step block size; fall back to one step for very small inputs.
        half = rows // 2
        row_block = half if (rows % 2 == 0 and half >= 8) else rows
    assert rows % row_block == 0

    # ---- fold softmax probs + both conv weight sets + identity into one conv ----
    probs = jax.nn.softmax(alphas.astype(jnp.float32), axis=0)   # (3,)
    eye = jnp.eye(C, dtype=jnp.float32)
    w_tap0 = probs[0] * eye + probs[1] * w2[0] + probs[2] * w3[0]
    w_tap1 = probs[1] * w2[1] + probs[2] * w3[1]
    w_tap2 = probs[2] * w3[2]
    w_stack = jnp.concatenate([w_tap0, w_tap1, w_tap2], axis=0)  # (3C, C)
    bias = (probs[1] * b2[0] + probs[2] * b3[0]).reshape(1, C)   # (1, C)

    # ---- layout: (B, C, N, T) -> (B*N, T, C); mask as lane-denser (B*N, T) ----
    x = jnp.transpose(x_bcnt, (0, 2, 3, 1)).reshape(rows, T, C)
    m = mask_bnt.reshape(rows, T).astype(x.dtype)

    grid = (rows // row_block,)

    out = pl.pallas_call(
        _mixed_op_kernel,
        out_shape=jax.ShapeDtypeStruct((rows, T, C), x.dtype),
        grid_spec=pltpu.PrefetchScalarGridSpec(
            num_scalar_prefetch=0,
            grid=grid,
            in_specs=[
                pl.BlockSpec((row_block, T, C), lambda i: (i, 0, 0)),  # x
                pl.BlockSpec((row_block, T), lambda i: (i, 0)),        # mask
                pl.BlockSpec((3 * C, C), lambda i: (0, 0)),            # folded W
                pl.BlockSpec((1, C), lambda i: (0, 0)),                # folded bias
            ],
            out_specs=pl.BlockSpec((row_block, T, C), lambda i: (i, 0, 0)),
        ),
        compiler_params=pltpu.CompilerParams(
            dimension_semantics=("parallel",)),
    )(x, m, w_stack, bias)

    return jnp.transpose(out.reshape(B, N, T, C), (0, 3, 1, 2))


def _reference(x_bcnt, mask_bnt, alphas, w2, b2, w3, b3):
    """Pure-JAX reference of the original (un-folded) forward, for correctness."""
    B, C, N, T = x_bcnt.shape
    probs = jax.nn.softmax(alphas.astype(jnp.float32), axis=0)
    xt = jnp.transpose(x_bcnt, (0, 2, 3, 1)).astype(jnp.float32)   # (B,N,T,C)
    m = mask_bnt[..., None].astype(jnp.float32)                    # (B,N,T,1)

    def conv(w, b, K):
        y = jnp.zeros_like(xt)
        for k in range(K):
            xs = jnp.pad(xt[:, :, :T - k, :], ((0, 0), (0, 0), (k, 0), (0, 0)))
            y = y + jnp.einsum('bntc,cd->bntd', xs, w[k])
        return y + b[0]

    ops = [xt * m, conv(w2, b2, 2) * m, conv(w3, b3, 3) * m]
    out = sum(p * o for p, o in zip(probs, ops))
    return jnp.transpose(out, (0, 3, 1, 2))


if __name__ == "__main__":
    key = jax.random.PRNGKey(0)
    k_x, k_m, k_a, k_w2, k_b2, k_w3, k_b3 = jax.random.split(key, 7)

    B, C, N, T = 2, 32, 8, 8          # batch, channels, nodes, time
    NUM_OPS = 3

    x = jax.random.normal(k_x, (B, C, N, T), dtype=jnp.float32)
    mask = (jax.random.uniform(k_m, (B, N, T)) > 0.2).astype(jnp.float32)

    # deterministic synthetic parameters (module __init__ inits alphas to zeros;
    # use small nonzero values so the softmax mixing is actually exercised)
    alphas = 0.1 * jax.random.normal(k_a, (NUM_OPS,), dtype=jnp.float32)
    w2 = 0.1 * jax.random.normal(k_w2, (2, C, C), dtype=jnp.float32)
    b2 = 0.1 * jax.random.normal(k_b2, (1, C), dtype=jnp.float32)
    w3 = 0.1 * jax.random.normal(k_w3, (3, C, C), dtype=jnp.float32)
    b3 = 0.1 * jax.random.normal(k_b3, (1, C), dtype=jnp.float32)

    fn = jax.jit(functools.partial(temporal_layer_mixed_op))
    out = fn(x, mask, alphas, w2, b2, w3, b3)
    out = jax.block_until_ready(out)

    ref = _reference(x, mask, alphas, w2, b2, w3, b3)
    assert out.shape == (B, C, N, T)
    assert jnp.allclose(out, ref, atol=1e-4, rtol=1e-4), "mismatch vs reference"

    # TODO(synk): Mode.ONE_PATH_RANDOM / TWO_PATHS multinomial sampling is host-side
    # control flow in the original module; only the forward mixing is kernelized.
    print("KERNEL_OK")
</pallas_src>

<mosaic_0001>
module attributes {stable_mosaic.version = 11 : i64} {
  func.func @_mixed_op_kernel(%arg0: i32, %arg1: memref<8x8x32xf32, #tpu.memory_space<vmem>>, %arg2: memref<8x8xf32, #tpu.memory_space<vmem>>, %arg3: memref<96x32xf32, #tpu.memory_space<vmem>>, %arg4: memref<1x32xf32, #tpu.memory_space<vmem>>, %arg5: memref<8x8x32xf32, #tpu.memory_space<vmem>>) attributes {dimension_semantics = [#tpu.dimension_semantics<parallel>], iteration_bounds = array<i64: 2>, scalar_prefetch = 0 : i64, scratch_operands = 0 : i64, tpu.core_type = #tpu.core_type<tc>, window_params = [{transform_indices = @transform_0, window_bounds = array<i64: 8, 8, 32>}, {transform_indices = @transform_1, window_bounds = array<i64: 8, 8>}, {pipeline_mode = #tpu.pipeline_mode<synchronous>, transform_indices = @transform_2, window_bounds = array<i64: 96, 32>}, {pipeline_mode = #tpu.pipeline_mode<synchronous>, transform_indices = @transform_3, window_bounds = array<i64: 1, 32>}, {transform_indices = @transform_4, window_bounds = array<i64: 8, 8, 32>}]} {
    %c0 = arith.constant 0 : index
    %c0_0 = arith.constant 0 : index
    %c0_1 = arith.constant 0 : index
    %0 = vector.load %arg1[%c0, %c0_0, %c0_1] : memref<8x8x32xf32, #tpu.memory_space<vmem>>, vector<8x8x32xf32>
    %cst = arith.constant 0.000000e+00 : f32
    %1 = vector.broadcast %cst : f32 to vector<8x1x32xf32>
    %2 = vector.extract_strided_slice %0 {offsets = [0, 0, 0], sizes = [8, 7, 32], strides = [1, 1, 1]} : vector<8x8x32xf32> to vector<8x7x32xf32>
    %3 = tpu.concatenate %1, %2 in 1 : vector<8x1x32xf32>, vector<8x7x32xf32> -> vector<8x8x32xf32>
    %cst_2 = arith.constant 0.000000e+00 : f32
    %4 = vector.broadcast %cst_2 : f32 to vector<8x2x32xf32>
    %5 = vector.extract_strided_slice %0 {offsets = [0, 0, 0], sizes = [8, 6, 32], strides = [1, 1, 1]} : vector<8x8x32xf32> to vector<8x6x32xf32>
    %6 = tpu.concatenate %4, %5 in 1 : vector<8x2x32xf32>, vector<8x6x32xf32> -> vector<8x8x32xf32>
    %7 = tpu.concatenate %0, %3, %6 in 2 : vector<8x8x32xf32>, vector<8x8x32xf32>, vector<8x8x32xf32> -> vector<8x8x96xf32>
    %8 = vector.shape_cast %7 : vector<8x8x96xf32> to vector<64x96xf32>
    %c0_3 = arith.constant 0 : index
    %c0_4 = arith.constant 0 : index
    %9 = vector.load %arg3[%c0_3, %c0_4] : memref<96x32xf32, #tpu.memory_space<vmem>>, vector<96x32xf32>
    %cst_5 = arith.constant dense<0.000000e+00> : vector<64x32xf32>
    %10 = tpu.matmul %8, %9, %cst_5 {dimension_numbers = #tpu.dot_dimension_numbers<[1], [0], [0], [1], [0, 0, 1, 1], [], []>} : vector<64x96xf32>, vector<96x32xf32>, vector<64x32xf32> -> vector<64x32xf32>
    %11 = vector.shape_cast %10 : vector<64x32xf32> to vector<8x8x32xf32>
    %c0_6 = arith.constant 0 : index
    %c0_7 = arith.constant 0 : index
    %12 = vector.load %arg4[%c0_6, %c0_7] : memref<1x32xf32, #tpu.memory_space<vmem>>, vector<1x32xf32>
    %13 = vector.shape_cast %12 : vector<1x32xf32> to vector<1x1x32xf32>
    %14 = vector.broadcast %13 : vector<1x1x32xf32> to vector<8x8x32xf32>
    %15 = arith.addf %11, %14 : vector<8x8x32xf32>
    %c0_8 = arith.constant 0 : index
    %c0_9 = arith.constant 0 : index
    %16 = vector.load %arg2[%c0_8, %c0_9] : memref<8x8xf32, #tpu.memory_space<vmem>>, vector<8x8xf32>
    %17 = vector.shape_cast %16 : vector<8x8xf32> to vector<8x8x1xf32>
    %18 = vector.broadcast %17 : vector<8x8x1xf32> to vector<8x8x32xf32>
    %19 = arith.mulf %15, %18 : vector<8x8x32xf32>
    %c0_10 = arith.constant 0 : index
    %c0_11 = arith.constant 0 : index
    %c0_12 = arith.constant 0 : index
    %20 = vector.load %arg5[%c0_10, %c0_11, %c0_12] : memref<8x8x32xf32, #tpu.memory_space<vmem>>, vector<8x8x32xf32>
    tpu.vector_store %arg5[%c0_10, %c0_11, %c0_12], %19 {strides = array<i32>} : memref<8x8x32xf32, #tpu.memory_space<vmem>>, vector<8x8x32xf32>,
    return
  }
  func.func @transform_0(%arg0: i32) -> (i32, i32, i32) {
    %c0_i32 = arith.constant 0 : i32
    %c0_i32_0 = arith.constant 0 : i32
    %c0_i32_1 = arith.constant 0 : i32
    return %arg0, %c0_i32, %c0_i32_0 : i32, i32, i32
  }
  func.func @transform_1(%arg0: i32) -> (i32, i32) {
    %c0_i32 = arith.constant 0 : i32
    %c0_i32_0 = arith.constant 0 : i32
    return %arg0, %c0_i32 : i32, i32
  }
  func.func @transform_2(%arg0: i32) -> (i32, i32) {
    %c0_i32 = arith.constant 0 : i32
    %c0_i32_0 = arith.constant 0 : i32
    %c0_i32_1 = arith.constant 0 : i32
    return %c0_i32, %c0_i32_0 : i32, i32
  }
  func.func @transform_3(%arg0: i32) -> (i32, i32) {
    %c0_i32 = arith.constant 0 : i32
    %c0_i32_0 = arith.constant 0 : i32
    %c0_i32_1 = arith.constant 0 : i32
    return %c0_i32, %c0_i32_0 : i32, i32
  }
  func.func @transform_4(%arg0: i32) -> (i32, i32, i32) {
    %c0_i32 = arith.constant 0 : i32
    %c0_i32_0 = arith.constant 0 : i32
    %c0_i32_1 = arith.constant 0 : i32
    return %arg0, %c0_i32, %c0_i32_0 : i32, i32, i32
  }
}

</mosaic_0001>

<llo_original>
// kernel: temporal_layer_mixed_op.1
$region0: #{temporal_layer_mixed_op.1}
  #allocation0 [shape = 'u32[]', space=smem, size = 0x4, offset = 0x4, fixed_abs, tag = 'smem constant byte address 0x4 - core index']
  #allocation1 [shape = 'u32[144,128]{1,0:T(1,128)}', space=vmem, size = 0x12000, scoped, tag = 'internal scratch']
  %s0 = inlined_call_operand.vmem [shape: f32[16,8,32], index: 0, kind: input, shape index: {}]
  %s1 = inlined_call_operand.vmem [shape: f32[16,8], index: 1, kind: input, shape index: {}]
  %s2 = inlined_call_operand.vmem [shape: f32[96,32], index: 2, kind: input, shape index: {}]
  %s3 = inlined_call_operand.vmem [shape: f32[1,32], index: 3, kind: input, shape index: {}]
  %s4 = inlined_call_operand.hbm [shape: f32[16,8,32], index: 4, kind: output, shape index: {}]
  %s5 = sld [smem:[#allocation0]]
  $region49: #{temporal_layer_mixed_op.1} parent=0
    _
  %s7 = ssub.s32 1, %s5
  %s8 = scalar_select 0, %s7, %s5
  $region1: #{temporal_layer_mixed_op.1} parent=0
    #allocation2 [shape = 'u8[65536]{0}', space=vmem, size = 0x10000, scoped, tag = 'output window, operand 0']
    #allocation3 [shape = 's32[2]{0}', space=sflag, size = 0x8, scoped, tag = 'scoped memory for temporal_layer_mixed_op.1']
    %9 = vsyncpa [#allocation3], 0
    %s10 = scalar_lea.sflag [#allocation3], 1
    %11 = vsyncpa %s10, 0
    loop: start=0, step=1, limit=4
    $region2: #{temporal_layer_mixed_op.1} parent=1 // loop_pre_header
      _
    $region3: #{temporal_layer_mixed_op.1} parent=1 // loop_header
      %s13 = sphi 0, %s17
      %p14 = scmp.ge.s32.totalorder %s13, 4
      %s23 = sphi 0, %s25
      %s26 = sphi 0, %s23
      %s27 = sphi 0, %s26
      %s43 = sphi 0, %s27
      %s49 = sphi 0, %s51
      %s52 = sphi 0, %s49
      %s53 = sphi 0, %s52
      %s69 = sphi 0, %s53
      %s73 = sphi 0, %s73
      %s75 = sphi 0, %s73
      %s76 = sphi 0, %s75
      %s90 = sphi 0, %s76
      %s94 = sphi 0, %s94
      %s96 = sphi 0, %s94
      %s97 = sphi 0, %s96
      %s111 = sphi 0, %s97
      %s117 = sphi 0, %s119
      %s120 = sphi 0, %s117
      %s121 = sphi 0, %s120
      %s137 = sphi 0, %s121
    $region4: #{temporal_layer_mixed_op.1} parent=1 // loop_header_branch
      %16 = sbr.rel (%p14) target = $region8
    $region5: #{temporal_layer_mixed_op.1} parent=1 // loop_body
      %s18 = ssub.s32 %s13, 1
      %s19 = ssub.s32 %s13, 2
      %s20 = sadd.s32 %s13, 1
      %s21 = ssub.s32 %s13, %s20
      %p22 = scmp.eq.s32.totalorder %s21, 0
      %s24 = sadd.s32 %s23, 1
      %s25 = scalar_select %p22, %s23, %s24
      %p28 = pneg %p22
      %p29 = scmp.eq.s32.totalorder %s13, 1
      %p30 = por %p28, %p29
      %p31 = scmp.ne.s32.totalorder %s23, %s26
      %p32 = scmp.eq.s32.totalorder %s13, 0
      %p33 = por %p31, %p32
      %p34 = scmp.ne.s32.totalorder %s23, %s26
      %p35 = scmp.eq.s32.totalorder %s18, 1
      %p36 = por %p34, %p35
      %p37 = scmp.ne.s32.totalorder %s26, %s27
      %p38 = scmp.eq.s32.totalorder %s18, 0
      %p39 = por %p37, %p38
      %p40 = scmp.ne.s32.totalorder %s26, %s27
      %p41 = scmp.eq.s32.totalorder %s19, 1
      %p42 = por %p40, %p41
      %p44 = scmp.ne.s32.totalorder %s27, %s43
      %p45 = scmp.eq.s32.totalorder %s19, 0
      %p46 = por %p44, %p45
      %s47 = ssub.s32 %s13, %s20
      %p48 = scmp.eq.s32.totalorder %s47, 0
      %s50 = sadd.s32 %s49, 1
      %s51 = scalar_select %p48, %s49, %s50
      %p54 = pneg %p48
      %p55 = scmp.eq.s32.totalorder %s13, 1
      %p56 = por %p54, %p55
      %p57 = scmp.ne.s32.totalorder %s49, %s52
      %p58 = scmp.eq.s32.totalorder %s13, 0
      %p59 = por %p57, %p58
      %p60 = scmp.ne.s32.totalorder %s49, %s52
      %p61 = scmp.eq.s32.totalorder %s18, 1
      %p62 = por %p60, %p61
      %p63 = scmp.ne.s32.totalorder %s52, %s53
      %p64 = scmp.eq.s32.totalorder %s18, 0
      %p65 = por %p63, %p64
      %p66 = scmp.ne.s32.totalorder %s52, %s53
      %p67 = scmp.eq.s32.totalorder %s19, 1
      %p68 = por %p66, %p67
      %p70 = scmp.ne.s32.totalorder %s53, %s69
      %p71 = scmp.eq.s32.totalorder %s19, 0
      %p72 = por %p70, %p71
      %s74 = sadd.s32 %s73, 1
      %p77 = scmp.eq.s32.totalorder %s13, 1
      %p78 = scmp.ne.s32.totalorder %s73, %s75
      %p79 = scmp.eq.s32.totalorder %s13, 0
      %p80 = por %p78, %p79
      %p81 = scmp.ne.s32.totalorder %s73, %s75
      %p82 = scmp.eq.s32.totalorder %s18, 1
      %p83 = por %p81, %p82
      %p84 = scmp.ne.s32.totalorder %s75, %s76
      %p85 = scmp.eq.s32.totalorder %s18, 0
      %p86 = por %p84, %p85
      %p87 = scmp.ne.s32.totalorder %s75, %s76
      %p88 = scmp.eq.s32.totalorder %s19, 1
      %p89 = por %p87, %p88
      %p91 = scmp.ne.s32.totalorder %s76, %s90
      %p92 = scmp.eq.s32.totalorder %s19, 0
      %p93 = por %p91, %p92
      %s95 = sadd.s32 %s94, 1
      %p98 = scmp.eq.s32.totalorder %s13, 1
      %p99 = scmp.ne.s32.totalorder %s94, %s96
      %p100 = scmp.eq.s32.totalorder %s13, 0
      %p101 = por %p99, %p100
      %p102 = scmp.ne.s32.totalorder %s94, %s96
      %p103 = scmp.eq.s32.totalorder %s18, 1
      %p104 = por %p102, %p103
      %p105 = scmp.ne.s32.totalorder %s96, %s97
      %p106 = scmp.eq.s32.totalorder %s18, 0
      %p107 = por %p105, %p106
      %p108 = scmp.ne.s32.totalorder %s96, %s97
      %p109 = scmp.eq.s32.totalorder %s19, 1
      %p110 = por %p108, %p109
      %p112 = scmp.ne.s32.totalorder %s97, %s111
      %p113 = scmp.eq.s32.totalorder %s19, 0
      %p114 = por %p112, %p113
      %s115 = ssub.s32 %s13, %s20
      %p116 = scmp.eq.s32.totalorder %s115, 0
      %s118 = sadd.s32 %s117, 1
      %s119 = scalar_select %p116, %s117, %s118
      %p122 = pneg %p116
      %p123 = scmp.eq.s32.totalorder %s13, 1
      %p124 = por %p122, %p123
      %p125 = scmp.ne.s32.totalorder %s117, %s120
      %p126 = scmp.eq.s32.totalorder %s13, 0
      %p127 = por %p125, %p126
      %p128 = scmp.ne.s32.totalorder %s117, %s120
      %p129 = scmp.eq.s32.totalorder %s18, 1
      %p130 = por %p128, %p129
      %p131 = scmp.ne.s32.totalorder %s120, %s121
      %p132 = scmp.eq.s32.totalorder %s18, 0
      %p133 = por %p131, %p132
      %p134 = scmp.ne.s32.totalorder %s120, %s121
      %p135 = scmp.eq.s32.totalorder %s19, 1
      %p136 = por %p134, %p135
      %p138 = scmp.ne.s32.totalorder %s121, %s137
      %p139 = scmp.eq.s32.totalorder %s19, 0
      %p140 = por %p138, %p139
      %p141 = scmp.le.s32.totalorder 1, %s13
      %p142 = scmp.lt.s32.totalorder %s13, 3
      %p143 = pnand %p141, %p142
      %p144 = pneg %p143
      // Predicated region
      $region9: #{temporal_layer_mixed_op.1} parent=5 // pred_check
        _
      $region10: #{temporal_layer_mixed_op.1} parent=5 // pred_check_branch
        %146 = sbr.rel (%p143) target = $region12
      $region11: #{temporal_layer_mixed_op.1} parent=5 // pred_region
        %s147 = ssub.s32 %s13, 1
        // Predicated region
        $region13: #{temporal_layer_mixed_op.1} parent=11 // pred_check
          %p148 = pneg %p86
        $region14: #{temporal_layer_mixed_op.1} parent=11 // pred_check_branch
          %150 = sbr.rel (%p148) target = $region16
        $region15: #{temporal_layer_mixed_op.1} parent=11 // pred_region
          _
        $region16: #{temporal_layer_mixed_op.1} parent=11 // pred_fallthru
          _
        // Predicated region
        $region17: #{temporal_layer_mixed_op.1} parent=11 // pred_check
          %p151 = pneg %p107
        $region18: #{temporal_layer_mixed_op.1} parent=11 // pred_check_branch
          %153 = sbr.rel (%p151) target = $region20
        $region19: #{temporal_layer_mixed_op.1} parent=11 // pred_region
          _
        $region20: #{temporal_layer_mixed_op.1} parent=11 // pred_fallthru
          _
      $region12: #{temporal_layer_mixed_op.1} parent=5 // pred_fallthru
        _
      %p154 = scmp.lt.s32.totalorder %s13, 2
      // Predicated region
      $region21: #{temporal_layer_mixed_op.1} parent=5 // pred_check
        %p155 = pneg %p154
      $region22: #{temporal_layer_mixed_op.1} parent=5 // pred_check_branch
        %157 = sbr.rel (%p155) target = $region24
      $region23: #{temporal_layer_mixed_op.1} parent=5 // pred_region
        // Predicated region
        $region25: #{temporal_layer_mixed_op.1} parent=23 // pred_check
          %p158 = pneg %p33
        $region26: #{temporal_layer_mixed_op.1} parent=23 // pred_check_branch
          %160 = sbr.rel (%p158) target = $region28
        $region27: #{temporal_layer_mixed_op.1} parent=23 // pred_region
          %s161 = smul.u32 8, %s13
          %p162 = scmp.lt.s32.totalorder %s161, 15
          %s163 = scalar_select %p162, %s161, 15
          %s164 = smul.addr %s163, 8
          %s165 = scalar_lea.vmem %s0, %s164
          %s166 = smul.u32 8, %s13
        $region28: #{temporal_layer_mixed_op.1} parent=23 // pred_fallthru
          _
        // Predicated region
        $region29: #{temporal_layer_mixed_op.1} parent=23 // pred_check
          %p167 = pneg %p59
        $region30: #{temporal_layer_mixed_op.1} parent=23 // pred_check_branch
          %169 = sbr.rel (%p167) target = $region32
        $region31: #{temporal_layer_mixed_op.1} parent=23 // pred_region
          %p170 = scmp.lt.s32.totalorder %s13, 1
          %s171 = scalar_select %p170, %s13, 1
          %s172 = smul.addr %s171, 8
          %s173 = scalar_lea.vmem %s1, %s172
        $region32: #{temporal_layer_mixed_op.1} parent=23 // pred_fallthru
          _
      $region24: #{temporal_layer_mixed_op.1} parent=5 // pred_fallthru
        _
      %p174 = scmp.le.s32.totalorder 1, %s13
      %p175 = scmp.lt.s32.totalorder %s13, 3
      %p176 = pnand %p174, %p175
      %p177 = pneg %p176
      // Predicated region
      $region33: #{temporal_layer_mixed_op.1} parent=5 // pred_check
        _
      $region34: #{temporal_layer_mixed_op.1} parent=5 // pred_check_branch
        %179 = sbr.rel (%p176) target = $region36
      $region35: #{temporal_layer_mixed_op.1} parent=5 // pred_region
        %s180 = ssub.s32 %s13, 1
        %s181 = smul.u32 8, %s18
        %p182 = scmp.lt.s32.totalorder %s181, 15
        %s183 = scalar_select %p182, %s181, 15
        %s184 = smul.addr %s183, 8
        %s185 = scalar_lea.vmem %s0, %s184
        %p186 = pneg %p39
        %p187 = pneg %p36
        %p188 = scmp.lt.s32.totalorder %s18, 1
        %s189 = scalar_select %p188, %s18, 1
        %s190 = smul.addr %s189, 8
        %s191 = scalar_lea.vmem %s1, %s190
        %p192 = pneg %p65
        %p193 = pneg %p62
        %p194 = pneg %p86
        %p195 = pneg %p83
        %p196 = pneg %p107
        %p197 = pneg %p104
        %p198 = pneg %p133
        %p199 = pneg %p130
        %s200 = sand.u32 %s120, 1
        %s201 = scalar_lea.sflag [#allocation3], %s200
        %s202 = sand.u32 %s120, 1
        %s203 = smul.addr %s202, 64
        %s204 = scalar_lea.vmem [#allocation2], %s203
        %s205 = smul.u32 8, %s18
        %p206 = scmp.lt.s32.totalorder %s205, 15
        %s207 = scalar_select %p206, %s205, 15
        %s208 = smul.addr %s207, 8
        %s209 = scalar_lea.vmem %s0, %s208
        %s210 = smul.u32 8, %s18
        %p211 = scmp.lt.s32.totalorder %s18, 1
        %s212 = scalar_select %p211, %s18, 1
        %s213 = smul.addr %s212, 8
        %s214 = scalar_lea.vmem %s1, %s213
        %s215 = smul.u32 8, %s18
        %v216 = vld [vmem:[%s209] sm:$0xff]
        %v217 = vld [vmem:[%s209 + $0x8] sm:$0xff]
        %v218 = vld [vmem:[%s209 + $0x10] sm:$0xff]
        %v219 = vld [vmem:[%s209 + $0x18] sm:$0xff]
        %v220 = vld [vmem:[%s209 + $0x20] sm:$0xff]
        %v221 = vld [vmem:[%s209 + $0x28] sm:$0xff]
        %v222 = vld [vmem:[%s209 + $0x30] sm:$0xff]
        %v223 = vld [vmem:[%s209 + $0x38] sm:$0xff]
        %v232 = vrot.slane %v216, 7
        %v233 = vrot.slane %v217, 7
        %v234 = vrot.slane %v218, 7
        %v235 = vrot.slane %v219, 7
        %v236 = vrot.slane %v220, 7
        %v237 = vrot.slane %v221, 7
        %v238 = vrot.slane %v222, 7
        %v239 = vrot.slane %v223, 7
        %vm248 = vcmask 1040384
        %v249 = vsel %vm248, 0.0, %v232
        %v250 = vsel %vm248, 0.0, %v233
        %v251 = vsel %vm248, 0.0, %v234
        %v252 = vsel %vm248, 0.0, %v235
        %v253 = vsel %vm248, 0.0, %v236
        %v254 = vsel %vm248, 0.0, %v237
        %v255 = vsel %vm248, 0.0, %v238
        %v256 = vsel %vm248, 0.0, %v239
        %v257 = vrot.slane %v216, 6
        %v258 = vrot.slane %v217, 6
        %v259 = vrot.slane %v218, 6
        %v260 = vrot.slane %v219, 6
        %v261 = vrot.slane %v220, 6
        %v262 = vrot.slane %v221, 6
        %v263 = vrot.slane %v222, 6
        %v264 = vrot.slane %v223, 6
        %vm273 = vcmask 1041408
        %v274 = vsel %vm273, 0.0, %v257
        %v275 = vsel %vm273, 0.0, %v258
        %v276 = vsel %vm273, 0.0, %v259
        %v277 = vsel %vm273, 0.0, %v260
        %v278 = vsel %vm273, 0.0, %v261
        %v279 = vsel %vm273, 0.0, %v262
        %v280 = vsel %vm273, 0.0, %v263
        %v281 = vsel %vm273, 0.0, %v264
        %290 = vrot.lane.b32.xlu0 %v249, 32
        %v291 = vpop.permute.xlu0 %290
        %292 = vrot.lane.b32.xlu0 %v250, 32
        %v293 = vpop.permute.xlu0 %292
        %294 = vrot.lane.b32.xlu0 %v251, 32
        %v295 = vpop.permute.xlu0 %294
        %296 = vrot.lane.b32.xlu0 %v252, 32
        %v297 = vpop.permute.xlu0 %296
        %298 = vrot.lane.b32.xlu0 %v253, 32
        %v299 = vpop.permute.xlu0 %298
        %300 = vrot.lane.b32.xlu0 %v254, 32
        %v301 = vpop.permute.xlu0 %300
        %302 = vrot.lane.b32.xlu0 %v255, 32
        %v303 = vpop.permute.xlu0 %302
        %304 = vrot.lane.b32.xlu0 %v256, 32
        %v305 = vpop.permute.xlu0 %304
        %322 = vrot.lane.b32.xlu0 %v274, 64
        %v323 = vpop.permute.xlu0 %322
        %324 = vrot.lane.b32.xlu0 %v275, 64
        %v325 = vpop.permute.xlu0 %324
        %326 = vrot.lane.b32.xlu0 %v276, 64
        %v327 = vpop.permute.xlu0 %326
        %328 = vrot.lane.b32.xlu0 %v277, 64
        %v329 = vpop.permute.xlu0 %328
        %330 = vrot.lane.b32.xlu0 %v278, 64
        %v331 = vpop.permute.xlu0 %330
        %332 = vrot.lane.b32.xlu0 %v279, 64
        %v333 = vpop.permute.xlu0 %332
        %334 = vrot.lane.b32.xlu0 %v280, 64
        %v335 = vpop.permute.xlu0 %334
        %336 = vrot.lane.b32.xlu0 %v281, 64
        %v337 = vpop.permute.xlu0 %336
        %vm346 = vcmask 261120
        %v347 = vsel %vm346, %v216, %v291
        %v348 = vsel %vm346, %v217, %v293
        %v349 = vsel %vm346, %v218, %v295
        %v350 = vsel %vm346, %v219, %v297
        %v351 = vsel %vm346, %v220, %v299
        %v352 = vsel %vm346, %v221, %v301
        %v353 = vsel %vm346, %v222, %v303
        %v354 = vsel %vm346, %v223, %v305
        %vm355 = vcmask 523264
        %v356 = vsel %vm355, %v347, %v323
        %v357 = vsel %vm355, %v348, %v325
        %v358 = vsel %vm355, %v349, %v327
        %v359 = vsel %vm355, %v350, %v329
        %v360 = vsel %vm355, %v351, %v331
        %v361 = vsel %vm355, %v352, %v333
        %v362 = vsel %vm355, %v353, %v335
        %v363 = vsel %vm355, %v354, %v337
        %v364 = vld [vmem:[%s2] sm:$0xff]
        %v365 = vld [vmem:[%s2 + $0x8] sm:$0xff]
        %v366 = vld [vmem:[%s2 + $0x10] sm:$0xff]
        %v367 = vld [vmem:[%s2 + $0x18] sm:$0xff]
        %v368 = vld [vmem:[%s2 + $0x20] sm:$0xff]
        %v369 = vld [vmem:[%s2 + $0x28] sm:$0xff]
        %v370 = vld [vmem:[%s2 + $0x30] sm:$0xff]
        %v371 = vld [vmem:[%s2 + $0x38] sm:$0xff]
        %v372 = vld [vmem:[%s2 + $0x40] sm:$0xff]
        %v373 = vld [vmem:[%s2 + $0x48] sm:$0xff]
        %v374 = vld [vmem:[%s2 + $0x50] sm:$0xff]
        %v375 = vld [vmem:[%s2 + $0x58] sm:$0xff]
        %vm376 = vcmask 785408
        %v378 = vsel %vm376, %v356, 0
        %v381 = vsel %vm376, %v357, 0
        %v384 = vsel %vm376, %v358, 0
        %v387 = vsel %vm376, %v359, 0
        %v390 = vsel %vm376, %v360, 0
        %v393 = vsel %vm376, %v361, 0
        %v396 = vsel %vm376, %v362, 0
        %v399 = vsel %vm376, %v363, 0
        %401 = vmatprep.subr.mxu0 0.0
        %402 = vmatpush1.msra.mxu0 %v364
        %403 = vmatprep.subr.mxu0 0.0
        %404 = vmatpush1.msra.mxu0 %v365
        %405 = vmatprep.subr.mxu0 0.0
        %406 = vmatpush1.msra.mxu0 %v366
        %407 = vmatprep.subr.mxu0 0.0
        %408 = vmatpush1.msra.mxu0 %v367
        %409 = vmatprep.subr.mxu0 0.0
        %410 = vmatpush1.msra.mxu0 %v368
        %411 = vmatprep.subr.mxu0 0.0
        %412 = vmatpush1.msra.mxu0 %v369
        %413 = vmatprep.subr.mxu0 0.0
        %414 = vmatpush1.msra.mxu0 %v370
        %415 = vmatprep.subr.mxu0 0.0
        %416 = vmatpush1.msra.mxu0 %v371
        %417 = vmatprep.subr.mxu0 0.0
        %418 = vmatpush1.msra.mxu0 %v372
        %419 = vmatprep.subr.mxu0 0.0
        %420 = vmatpush1.msra.mxu0 %v373
        %421 = vmatprep.subr.mxu0 0.0
        %422 = vmatpush1.msra.mxu0 %v374
        %423 = vmatprep.subr.mxu0 0.0
        %424 = vmatpush1.msra.mxu0 %v375
        %425 = vmatprep.subr.mxu0 0.0
        %426 = vmatpush1.msra.mxu0 0.0
        %427 = vmatprep.subr.mxu0 0.0
        %428 = vmatpush1.msra.mxu0 0.0
        %429 = vmatprep.subr.mxu0 0.0
        %430 = vmatpush1.msra.mxu0 0.0
        %431 = vmatprep.subr.mxu0 0.0
        %432 = vmatpush1.msra.mxu0 0.0
        %433 = vmatprep.subr.mxu0 0.0
        %434 = vmatpush1.msra.mxu0 0.0
        %435 = vmatprep.subr.mxu0 0.0
        %436 = vmatpush1.msra.mxu0 0.0
        %437 = vmatprep.subr.mxu0 0.0
        %438 = vmatpush1.msra.mxu0 0.0
        %439 = vmatprep.subr.mxu0 0.0
        %440 = vmatpush1.msra.mxu0 0.0
        %441 = vmatprep.subr.mxu0 0.0
        %442 = vmatpush1.msra.mxu0 0.0
        %443 = vmatprep.subr.mxu0 0.0
        %444 = vmatpush1.msra.mxu0 0.0
        %445 = vmatprep.subr.mxu0 0.0
        %446 = vmatpush1.msra.mxu0 0.0
        %447 = vmatprep.subr.mxu0 0.0
        %448 = vmatpush1.msra.mxu0 0.0
        %449 = vmatprep.subr.mxu0 0.0
        %450 = vmatpush1.msra.mxu0 0.0
        %451 = vmatprep.subr.mxu0 0.0
        %452 = vmatpush1.msra.mxu0 0.0
        %453 = vmatprep.subr.mxu0 0.0
        %454 = vmatpush1.msra.mxu0 0.0
        %455 = vmatprep.subr.mxu0 0.0
        %456 = vmatpush1.msra.mxu0 0.0
        %457 = vmatprep.subr.mxu0 0.0
        %458 = vmatpush1.msra.mxu0 0.0
        %459 = vmatprep.subr.mxu0 0.0
        %460 = vmatpush1.msra.mxu0 0.0
        %461 = vmatprep.subr.mxu0 0.0
        %462 = vmatpush1.msra.mxu0 0.0
        %463 = vmatprep.subr.mxu0 0.0
        %464 = vmatpush1.msra.mxu0 0.0
        %465 = vmatprep.mubr.f32.mxu0 0.0
        %466 = vmatmul.mubr.f32.gmra.mrb[0].mxu0 %v378
        %v467 = vpop.f32.mrb[0].mxu0
        %v468 = vadd.f32 0.0, %v467
        %v469 = vpop.f32.mrb[0].mxu0
        %470 = vmatprep.mubr.f32.mxu0 0.0
        %471 = vmatmul.mubr.f32.gmra.mrb[0].mxu0 %v381
        %v472 = vpop.f32.mrb[0].mxu0
        %v473 = vadd.f32 0.0, %v472
        %v474 = vpop.f32.mrb[0].mxu0
        %475 = vmatprep.mubr.f32.mxu0 0.0
        %476 = vmatmul.mubr.f32.gmra.mrb[0].mxu0 %v384
        %v477 = vpop.f32.mrb[0].mxu0
        %v478 = vadd.f32 0.0, %v477
        %v479 = vpop.f32.mrb[0].mxu0
        %480 = vmatprep.mubr.f32.mxu0 0.0
        %481 = vmatmul.mubr.f32.gmra.mrb[0].mxu0 %v387
        %v482 = vpop.f32.mrb[0].mxu0
        %v483 = vadd.f32 0.0, %v482
        %v484 = vpop.f32.mrb[0].mxu0
        %485 = vmatprep.mubr.f32.mxu0 0.0
        %486 = vmatmul.mubr.f32.gmra.mrb[0].mxu0 %v390
        %v487 = vpop.f32.mrb[0].mxu0
        %v488 = vadd.f32 0.0, %v487
        %v489 = vpop.f32.mrb[0].mxu0
        %490 = vmatprep.mubr.f32.mxu0 0.0
        %491 = vmatmul.mubr.f32.gmra.mrb[0].mxu0 %v393
        %v492 = vpop.f32.mrb[0].mxu0
        %v493 = vadd.f32 0.0, %v492
        %v494 = vpop.f32.mrb[0].mxu0
        %495 = vmatprep.mubr.f32.mxu0 0.0
        %496 = vmatmul.mubr.f32.gmra.mrb[0].mxu0 %v396
        %v497 = vpop.f32.mrb[0].mxu0
        %v498 = vadd.f32 0.0, %v497
        %v499 = vpop.f32.mrb[0].mxu0
        %500 = vmatprep.mubr.f32.mxu0 0.0
        %501 = vmatmul.mubr.f32.gmra.mrb[0].mxu0 %v399
        %v502 = vpop.f32.mrb[0].mxu0
        %v503 = vadd.f32 0.0, %v502
        %v504 = vpop.f32.mrb[0].mxu0
        %505 = vdwg.mxu0
        %v506 = vld [vmem:[%s3] sm:$0x1]
        %v508 = vlaneseq
        %v509 = vshrl.u32 %v508, 7
        %v510 = vsub.s32 0, %v509
        %v511 = vrot.slane %v506, %v510
        %v513 = vadd.f32 %v468, %v511
        %v514 = vadd.f32 %v473, %v511
        %v515 = vadd.f32 %v478, %v511
        %v516 = vadd.f32 %v483, %v511
        %v517 = vadd.f32 %v488, %v511
        %v518 = vadd.f32 %v493, %v511
        %v519 = vadd.f32 %v498, %v511
        %v520 = vadd.f32 %v503, %v511
        %v521 = vld [vmem:[%s214] sm:$0xff]
        %v522 = vlaneseq
        %v523 = vshrl.u32 %v522, 7
        %v524 = vsub.s32 0, %v523
        %v525 = vrot.slane %v521, %v524
        %527 = vbcast.lane.b32.xlu0 %v525, 256
        %v528 = vpop.permute.xlu0 %527
        %v529 = vlaneseq
        %v530 = vshrl.u32 %v529, 7
        %v531 = vsub.s32 1, %v530
        %v532 = vrot.slane %v521, %v531
        %534 = vbcast.lane.b32.xlu0 %v532, 256
        %v535 = vpop.permute.xlu0 %534
        %v536 = vlaneseq
        %v537 = vshrl.u32 %v536, 7
        %v538 = vsub.s32 2, %v537
        %v539 = vrot.slane %v521, %v538
        %541 = vbcast.lane.b32.xlu0 %v539, 256
        %v542 = vpop.permute.xlu0 %541
        %v543 = vlaneseq
        %v544 = vshrl.u32 %v543, 7
        %v545 = vsub.s32 3, %v544
        %v546 = vrot.slane %v521, %v545
        %548 = vbcast.lane.b32.xlu0 %v546, 256
        %v549 = vpop.permute.xlu0 %548
        %v550 = vlaneseq
        %v551 = vshrl.u32 %v550, 7
        %v552 = vsub.s32 4, %v551
        %v553 = vrot.slane %v521, %v552
        %555 = vbcast.lane.b32.xlu0 %v553, 256
        %v556 = vpop.permute.xlu0 %555
        %v557 = vlaneseq
        %v558 = vshrl.u32 %v557, 7
        %v559 = vsub.s32 5, %v558
        %v560 = vrot.slane %v521, %v559
        %562 = vbcast.lane.b32.xlu0 %v560, 256
        %v563 = vpop.permute.xlu0 %562
        %v564 = vlaneseq
        %v565 = vshrl.u32 %v564, 7
        %v566 = vsub.s32 6, %v565
        %v567 = vrot.slane %v521, %v566
        %569 = vbcast.lane.b32.xlu0 %v567, 256
        %v570 = vpop.permute.xlu0 %569
        %v571 = vlaneseq
        %v572 = vshrl.u32 %v571, 7
        %v573 = vsub.s32 7, %v572
        %v574 = vrot.slane %v521, %v573
        %576 = vbcast.lane.b32.xlu0 %v574, 256
        %v577 = vpop.permute.xlu0 %576
        %v578 = vmul.f32 %v513, %v528
        %v579 = vmul.f32 %v514, %v535
        %v580 = vmul.f32 %v515, %v542
        %v581 = vmul.f32 %v516, %v549
        %v582 = vmul.f32 %v517, %v556
        %v583 = vmul.f32 %v518, %v563
        %v584 = vmul.f32 %v519, %v570
        %v585 = vmul.f32 %v520, %v577
        %586 = vst.msk [vmem:[%s204] sm:$0xff] %vm346, %v578
        %587 = vst.msk [vmem:[%s204 + $0x8] sm:$0xff] %vm346, %v579
        %588 = vst.msk [vmem:[%s204 + $0x10] sm:$0xff] %vm346, %v580
        %589 = vst.msk [vmem:[%s204 + $0x18] sm:$0xff] %vm346, %v581
        %590 = vst.msk [vmem:[%s204 + $0x20] sm:$0xff] %vm346, %v582
        %591 = vst.msk [vmem:[%s204 + $0x28] sm:$0xff] %vm346, %v583
        %592 = vst.msk [vmem:[%s204 + $0x30] sm:$0xff] %vm346, %v584
        %593 = vst.msk [vmem:[%s204 + $0x38] sm:$0xff] %vm346, %v585
        %s594 = sand.u32 %s120, 1
        %s595 = scalar_lea.sflag [#allocation3], %s594
        %s596 = sand.u32 %s120, 1
        %s597 = smul.addr %s596, 64
        %s598 = scalar_lea.vmem [#allocation2], %s597
        // Predicated region
        $region37: #{temporal_layer_mixed_op.1} parent=35 // pred_check
          %p599 = pneg %p130
        $region38: #{temporal_layer_mixed_op.1} parent=35 // pred_check_branch
          %601 = sbr.rel (%p599) target = $region40
        $region39: #{temporal_layer_mixed_op.1} parent=35 // pred_region
          %s602 = smul.u32 8, %s18
          %s604 = ssub.s32 1024, 1024
          %605 = vsyncadd %s595, %s604
          %s606 = smul.addr %s602, 128
          %s607 = scalar_lea.hbm %s4, %s606
          %s608 = sshll.u32 %s598, 4
          %s609 = int_to_ptr.vmem [resolvable:$true] %s608
          %614 = dma.vmem_to_hbm [thread:$0]  %s609, 1024, %s607, %s595, 128, 128, 8
        $region40: #{temporal_layer_mixed_op.1} parent=35 // pred_fallthru
          _
      $region36: #{temporal_layer_mixed_op.1} parent=5 // pred_fallthru
        _
      %p615 = scmp.le.s32.totalorder 2, %s13
      // Predicated region
      $region41: #{temporal_layer_mixed_op.1} parent=5 // pred_check
        %p616 = pneg %p615
      $region42: #{temporal_layer_mixed_op.1} parent=5 // pred_check_branch
        %618 = sbr.rel (%p616) target = $region44
      $region43: #{temporal_layer_mixed_op.1} parent=5 // pred_region
        %s619 = ssub.s32 %s13, 2
        // Predicated region
        $region45: #{temporal_layer_mixed_op.1} parent=43 // pred_check
          %p620 = pneg %p136
        $region46: #{temporal_layer_mixed_op.1} parent=43 // pred_check_branch
          %622 = sbr.rel (%p620) target = $region48
        $region47: #{temporal_layer_mixed_op.1} parent=43 // pred_region
          %s623 = sand.u32 %s121, 1
          %s624 = scalar_lea.sflag [#allocation3], %s623
          %s625 = sand.u32 %s121, 1
          %s626 = smul.addr %s625, 64
          %s627 = scalar_lea.vmem [#allocation2], %s626
          %628 = dma.done %s624, 1024
        $region48: #{temporal_layer_mixed_op.1} parent=43 // pred_fallthru
          _
      $region44: #{temporal_layer_mixed_op.1} parent=5 // pred_fallthru
        _
    $region6: #{temporal_layer_mixed_op.1} parent=1 // loop_footer
      %s17 = sadd.s32 1, %s13
    $region7: #{temporal_layer_mixed_op.1} parent=1 // loop_footer_branch
      %12 = sbr.rel target = $region3
    $region8: #{temporal_layer_mixed_op.1} parent=1 // loop_exit
      _
    %629 = vsyncpa [#allocation3], 1
    %s630 = scalar_lea.sflag [#allocation3], 1
    %631 = vsyncpa %s630, 1

</llo_original>
